<compile_context>
chip_gen: v7x
topology: tpu7x:2x2x1
jax: 0.10.0
libtpu: 0.0.40
codegen_flags: <defaults>
</compile_context>

<pallas_src>
import functools

import jax
import jax.numpy as jnp
from jax.experimental import pallas as pl
from jax.experimental.pallas import tpu as pltpu


def _channel_attention_kernel(x_ref, w1_ref, w2_ref, o_ref,
                              sum_acc, max_acc, *, hw_total, thw):
    # x_ref : (1, C, THW)   current (batch, spatial-tile) block
    # w1_ref: (hidden, C)   fc.0 weight (native conv layout, squeezed)
    # w2_ref: (C, hidden)   fc.2 weight (native conv layout, squeezed)
    # o_ref : (1, C, 1)     per-batch attention logits (written at finalize)
    # sum_acc, max_acc: (C, 1) f32 VMEM scratch carried across the HW grid axis.
    hw_step = pl.program_id(1)
    n_hw = pl.num_programs(1)

    @pl.when(hw_step == 0)
    def _init():
        sum_acc[...] = jnp.zeros_like(sum_acc)
        max_acc[...] = jnp.full_like(max_acc, -jnp.inf)

    x = x_ref[0].astype(jnp.float32)                      # (C, THW)
    # Mask lanes past the true H*W extent (tail tile / stale padded lanes).
    lane = jax.lax.broadcasted_iota(jnp.int32, x.shape, 1)
    valid = (hw_step * thw + lane) < hw_total

    sum_acc[...] += jnp.sum(jnp.where(valid, x, 0.0), axis=-1, keepdims=True)
    max_acc[...] = jnp.maximum(
        max_acc[...],
        jnp.max(jnp.where(valid, x, -jnp.inf), axis=-1, keepdims=True))

    @pl.when(hw_step == n_hw - 1)
    def _finalize():
        avg = sum_acc[...] * (1.0 / hw_total)             # (C, 1) adaptive avg pool
        pooled = jnp.concatenate([avg, max_acc[...]], axis=-1)   # (C, 2) col0=avg col1=max
        # fc: Conv2d(C, C//16, 1, bias=False) -> ReLU -> Conv2d(C//16, C, 1, bias=False)
        h = jnp.dot(w1_ref[...], pooled, preferred_element_type=jnp.float32)  # (hid, 2)
        h = jnp.maximum(h, 0.0)
        y = jnp.dot(w2_ref[...], h, preferred_element_type=jnp.float32)       # (C, 2)
        out = jax.nn.sigmoid(y[:, 0:1] + y[:, 1:2])                           # (C, 1)
        o_ref[...] = out[jnp.newaxis].astype(o_ref.dtype)                     # (1, C, 1)


def _pick_thw(C, HW, bytes_per_elem, budget_bytes=8 * 1024 * 1024):
    """Largest multiple-of-128 spatial tile whose double-buffered input fits budget."""
    hw_padded = ((HW + 127) // 128) * 128
    max_lanes = (budget_bytes // (2 * C * bytes_per_elem)) // 128 * 128
    return int(min(hw_padded, max(128, max_lanes)))


def channel_attention(x, w_fc0, w_fc2, *, thw=None):
    """x: (B, C, H, W); w_fc0: (C//16, C, 1, 1); w_fc2: (C, C//16, 1, 1).
    Returns sigmoid(fc(avg_pool(x)) + fc(max_pool(x))) with shape (B, C, 1, 1)."""
    B, C, H, W = x.shape
    hidden = w_fc0.shape[0]
    HW = H * W
    x_flat = x.reshape(B, C, HW)

    # 1x1 convs with bias=False are matmuls; weights used in native layout (no transpose).
    w1 = w_fc0.reshape(hidden, C)      # (hidden, C)
    w2 = w_fc2.reshape(C, hidden)      # (C, hidden)

    itemsize = jnp.dtype(x.dtype).itemsize
    if thw is None:
        thw = _pick_thw(C, HW, itemsize)
    n_hw = pl.cdiv(HW, thw)

    kernel = functools.partial(_channel_attention_kernel, hw_total=HW, thw=thw)

    cost = pl.CostEstimate(
        flops=2 * B * C * HW + 2 * B * 2 * C * hidden * 2,
        transcendentals=B * C,
        bytes_accessed=B * C * HW * itemsize + B * C * itemsize + 2 * C * hidden * 4,
    )

    out = pl.pallas_call(
        kernel,
        out_shape=jax.ShapeDtypeStruct((B, C, 1), x.dtype),
        grid_spec=pltpu.PrefetchScalarGridSpec(
            num_scalar_prefetch=0,
            grid=(B, n_hw),
            in_specs=[
                pl.BlockSpec((1, C, thw), lambda b, s: (b, 0, s)),
                pl.BlockSpec((hidden, C), lambda b, s: (0, 0)),
                pl.BlockSpec((C, hidden), lambda b, s: (0, 0)),
            ],
            out_specs=pl.BlockSpec((1, C, 1), lambda b, s: (b, 0, 0)),
            scratch_shapes=[
                pltpu.VMEM((C, 1), jnp.float32),   # running sum
                pltpu.VMEM((C, 1), jnp.float32),   # running max
            ],
        ),
        compiler_params=pltpu.CompilerParams(
            dimension_semantics=("parallel", "arbitrary")),
        cost_estimate=cost,
    )(x_flat, w1, w2)

    return out.reshape(B, C, 1, 1)


def _reference(x, w_fc0, w_fc2):
    B, C, H, W = x.shape
    hidden = w_fc0.shape[0]
    w1 = w_fc0.reshape(hidden, C)
    w2 = w_fc2.reshape(C, hidden)

    def fc(p):  # p: (B, C)
        h = jnp.maximum(p @ w1.T, 0.0)
        return h @ w2.T

    avg = jnp.mean(x, axis=(2, 3))
    mx = jnp.max(x, axis=(2, 3))
    return jax.nn.sigmoid(fc(avg) + fc(mx)).reshape(B, C, 1, 1)


if __name__ == "__main__":
    key = jax.random.PRNGKey(0)
    k_x, k_w0, k_w2 = jax.random.split(key, 3)

    B, C, H, W = 2, 64, 16, 16          # C must be divisible by 16 (fc hardcodes //16)
    hidden = C // 16

    x = jax.random.normal(k_x, (B, C, H, W), dtype=jnp.float32)
    # Deterministic synthetic conv weights (Conv2d(..., 1, bias=False) shapes).
    w_fc0 = jax.random.normal(k_w0, (hidden, C, 1, 1), dtype=jnp.float32) * (1.0 / C) ** 0.5
    w_fc2 = jax.random.normal(k_w2, (C, hidden, 1, 1), dtype=jnp.float32) * (1.0 / hidden) ** 0.5

    # thw=128 -> 2 spatial tiles: exercises the carried sum/max accumulator path.
    out = channel_attention(x, w_fc0, w_fc2, thw=128)
    out = jax.block_until_ready(out)

    ref = _reference(x, w_fc0, w_fc2)
    assert out.shape == (B, C, 1, 1)
    assert jnp.allclose(out, ref, atol=1e-5, rtol=1e-5), "mismatch vs reference"

    # Non-multiple-of-128 spatial extent (H*W = 144) -> exercises tail-lane masking.
    x2 = jax.random.normal(k_x, (B, C, 12, 12), dtype=jnp.float32)
    out2 = jax.block_until_ready(channel_attention(x2, w_fc0, w_fc2, thw=128))
    ref2 = _reference(x2, w_fc0, w_fc2)
    assert jnp.allclose(out2, ref2, atol=1e-5, rtol=1e-5), "mismatch vs reference (masked tail)"

    print("KERNEL_OK")
</pallas_src>

<mosaic_0001>
module attributes {stable_mosaic.version = 11 : i64} {
  func.func @_channel_attention_kernel(%arg0: i32, %arg1: i32, %arg2: memref<1x64x128xf32, #tpu.memory_space<vmem>>, %arg3: memref<4x64xf32, #tpu.memory_space<vmem>>, %arg4: memref<64x4xf32, #tpu.memory_space<vmem>>, %arg5: memref<1x64x1xf32, #tpu.memory_space<vmem>>, %arg6: memref<64x1xf32, #tpu.memory_space<vmem>>, %arg7: memref<64x1xf32, #tpu.memory_space<vmem>>) attributes {dimension_semantics = [#tpu.dimension_semantics<parallel>, #tpu.dimension_semantics<arbitrary>], iteration_bounds = array<i64: 2, 2>, scalar_prefetch = 0 : i64, scratch_operands = 2 : i64, tpu.core_type = #tpu.core_type<tc>, window_params = [{transform_indices = @transform_0, window_bounds = array<i64: 1, 64, 128>}, {pipeline_mode = #tpu.pipeline_mode<synchronous>, transform_indices = @transform_1, window_bounds = array<i64: 4, 64>}, {pipeline_mode = #tpu.pipeline_mode<synchronous>, transform_indices = @transform_2, window_bounds = array<i64: 64, 4>}, {transform_indices = @transform_3, window_bounds = array<i64: 1, 64, 1>}]} {
    %c0_i32 = arith.constant 0 : i32
    %0 = arith.cmpi eq, %arg1, %c0_i32 : i32
    %1 = arith.extui %0 : i1 to i32
    %c0_i32_0 = arith.constant 0 : i32
    %2 = arith.cmpi ne, %1, %c0_i32_0 : i32
    scf.if %2 {
      %cst_15 = arith.constant 0.000000e+00 : f32
      %28 = vector.broadcast %cst_15 : f32 to vector<64x1xf32>
      %c0_16 = arith.constant 0 : index
      %c0_17 = arith.constant 0 : index
      %29 = vector.load %arg6[%c0_16, %c0_17] : memref<64x1xf32, #tpu.memory_space<vmem>>, vector<64x1xf32>
      tpu.vector_store %arg6[%c0_16, %c0_17], %28 {strides = array<i32>} : memref<64x1xf32, #tpu.memory_space<vmem>>, vector<64x1xf32>,
      %cst_18 = arith.constant 0xFF800000 : f32
      %30 = vector.broadcast %cst_18 : f32 to vector<64x1xf32>
      %c0_19 = arith.constant 0 : index
      %c0_20 = arith.constant 0 : index
      %31 = vector.load %arg7[%c0_19, %c0_20] : memref<64x1xf32, #tpu.memory_space<vmem>>, vector<64x1xf32>
      tpu.vector_store %arg7[%c0_19, %c0_20], %30 {strides = array<i32>} : memref<64x1xf32, #tpu.memory_space<vmem>>, vector<64x1xf32>,
    } else {
    }
    %c0 = arith.constant 0 : index
    %c0_1 = arith.constant 0 : index
    %c0_2 = arith.constant 0 : index
    %3 = vector.load %arg2[%c0, %c0_1, %c0_2] : memref<1x64x128xf32, #tpu.memory_space<vmem>>, vector<1x64x128xf32>
    %4 = vector.shape_cast %3 : vector<1x64x128xf32> to vector<64x128xf32>
    %5 = tpu.iota {dimensions = array<i32: 1>} : vector<64x128xi32>
    %c128_i32 = arith.constant 128 : i32
    %6 = arith.muli %arg1, %c128_i32 : i32
    %7 = vector.broadcast %6 : i32 to vector<64x128xi32>
    %8 = arith.addi %7, %5 : vector<64x128xi32>
    %c256_i32 = arith.constant 256 : i32
    %9 = vector.broadcast %c256_i32 : i32 to vector<64x128xi32>
    %10 = arith.cmpi slt, %8, %9 : vector<64x128xi32>
    %c0_3 = arith.constant 0 : index
    %c0_4 = arith.constant 0 : index
    %11 = vector.load %arg6[%c0_3, %c0_4] : memref<64x1xf32, #tpu.memory_space<vmem>>, vector<64x1xf32>
    %cst = arith.constant 0.000000e+00 : f32
    %12 = vector.broadcast %cst : f32 to vector<64x128xf32>
    %13 = arith.select %10, %4, %12 : vector<64x128xi1>, vector<64x128xf32>
    %cst_5 = arith.constant dense<0.000000e+00> : vector<64xf32>
    %14 = vector.multi_reduction <add>, %13, %cst_5 [1] : vector<64x128xf32> to vector<64xf32>
    %15 = vector.shape_cast %14 : vector<64xf32> to vector<64x1xf32>
    %16 = arith.addf %11, %15 : vector<64x1xf32>
    %c0_6 = arith.constant 0 : index
    %c0_7 = arith.constant 0 : index
    %17 = vector.load %arg6[%c0_6, %c0_7] : memref<64x1xf32, #tpu.memory_space<vmem>>, vector<64x1xf32>
    tpu.vector_store %arg6[%c0_6, %c0_7], %16 {strides = array<i32>} : memref<64x1xf32, #tpu.memory_space<vmem>>, vector<64x1xf32>,
    %c0_8 = arith.constant 0 : index
    %c0_9 = arith.constant 0 : index
    %18 = vector.load %arg7[%c0_8, %c0_9] : memref<64x1xf32, #tpu.memory_space<vmem>>, vector<64x1xf32>
    %cst_10 = arith.constant 0xFF800000 : f32
    %19 = vector.broadcast %cst_10 : f32 to vector<64x128xf32>
    %20 = arith.select %10, %4, %19 : vector<64x128xi1>, vector<64x128xf32>
    %cst_11 = arith.constant dense<0xFF800000> : vector<64xf32>
    %21 = vector.multi_reduction <maximumf>, %20, %cst_11 [1] : vector<64x128xf32> to vector<64xf32>
    %22 = vector.shape_cast %21 : vector<64xf32> to vector<64x1xf32>
    %23 = arith.maximumf %18, %22 : vector<64x1xf32>
    %c0_12 = arith.constant 0 : index
    %c0_13 = arith.constant 0 : index
    %24 = vector.load %arg7[%c0_12, %c0_13] : memref<64x1xf32, #tpu.memory_space<vmem>>, vector<64x1xf32>
    tpu.vector_store %arg7[%c0_12, %c0_13], %23 {strides = array<i32>} : memref<64x1xf32, #tpu.memory_space<vmem>>, vector<64x1xf32>,
    %c1_i32 = arith.constant 1 : i32
    %25 = arith.cmpi eq, %arg1, %c1_i32 : i32
    %26 = arith.extui %25 : i1 to i32
    %c0_i32_14 = arith.constant 0 : i32
    %27 = arith.cmpi ne, %26, %c0_i32_14 : i32
    scf.if %27 {
      %c0_15 = arith.constant 0 : index
      %c0_16 = arith.constant 0 : index
      %28 = vector.load %arg6[%c0_15, %c0_16] : memref<64x1xf32, #tpu.memory_space<vmem>>, vector<64x1xf32>
      %cst_17 = arith.constant 3.906250e-03 : f32
      %29 = vector.broadcast %cst_17 : f32 to vector<64x1xf32>
      %30 = arith.mulf %28, %29 : vector<64x1xf32>
      %c0_18 = arith.constant 0 : index
      %c0_19 = arith.constant 0 : index
      %31 = vector.load %arg7[%c0_18, %c0_19] : memref<64x1xf32, #tpu.memory_space<vmem>>, vector<64x1xf32>
      %32 = tpu.concatenate %30, %31 in 1 : vector<64x1xf32>, vector<64x1xf32> -> vector<64x2xf32>
      %c0_20 = arith.constant 0 : index
      %c0_21 = arith.constant 0 : index
      %33 = vector.load %arg3[%c0_20, %c0_21] : memref<4x64xf32, #tpu.memory_space<vmem>>, vector<4x64xf32>
      %cst_22 = arith.constant dense<0.000000e+00> : vector<4x2xf32>
      %34 = tpu.matmul %33, %32, %cst_22 {dimension_numbers = #tpu.dot_dimension_numbers<[1], [0], [0], [1], [0, 0, 1, 1], [], []>} : vector<4x64xf32>, vector<64x2xf32>, vector<4x2xf32> -> vector<4x2xf32>
      %cst_23 = arith.constant 0.000000e+00 : f32
      %35 = vector.broadcast %cst_23 : f32 to vector<4x2xf32>
      %36 = arith.maximumf %34, %35 : vector<4x2xf32>
      %c0_24 = arith.constant 0 : index
      %c0_25 = arith.constant 0 : index
      %37 = vector.load %arg4[%c0_24, %c0_25] : memref<64x4xf32, #tpu.memory_space<vmem>>, vector<64x4xf32>
      %cst_26 = arith.constant dense<0.000000e+00> : vector<64x2xf32>
      %38 = tpu.matmul %37, %36, %cst_26 {dimension_numbers = #tpu.dot_dimension_numbers<[1], [0], [0], [1], [0, 0, 1, 1], [], []>} : vector<64x4xf32>, vector<4x2xf32>, vector<64x2xf32> -> vector<64x2xf32>
      %39 = vector.extract_strided_slice %38 {offsets = [0, 0], sizes = [64, 1], strides = [1, 1]} : vector<64x2xf32> to vector<64x1xf32>
      %40 = vector.extract_strided_slice %38 {offsets = [0, 1], sizes = [64, 1], strides = [1, 1]} : vector<64x2xf32> to vector<64x1xf32>
      %41 = arith.addf %39, %40 : vector<64x1xf32>
      %42 = arith.negf %41 : vector<64x1xf32>
      %43 = math.exp %42 : vector<64x1xf32>
      %cst_27 = arith.constant 1.000000e+00 : f32
      %44 = vector.broadcast %cst_27 : f32 to vector<64x1xf32>
      %45 = arith.addf %44, %43 : vector<64x1xf32>
      %46 = arith.divf %44, %45 : vector<64x1xf32>
      %47 = vector.shape_cast %46 : vector<64x1xf32> to vector<1x64x1xf32>
      %c0_28 = arith.constant 0 : index
      %c0_29 = arith.constant 0 : index
      %c0_30 = arith.constant 0 : index
      %48 = vector.load %arg5[%c0_28, %c0_29, %c0_30] : memref<1x64x1xf32, #tpu.memory_space<vmem>>, vector<1x64x1xf32>
      tpu.vector_store %arg5[%c0_28, %c0_29, %c0_30], %47 {strides = array<i32>} : memref<1x64x1xf32, #tpu.memory_space<vmem>>, vector<1x64x1xf32>,
    } else {
    }
    return
  }
  func.func @transform_0(%arg0: i32, %arg1: i32) -> (i32, i32, i32) {
    %c0_i32 = arith.constant 0 : i32
    %c0_i32_0 = arith.constant 0 : i32
    return %arg0, %c0_i32, %arg1 : i32, i32, i32
  }
  func.func @transform_1(%arg0: i32, %arg1: i32) -> (i32, i32) {
    %c0_i32 = arith.constant 0 : i32
    %c0_i32_0 = arith.constant 0 : i32
    %c0_i32_1 = arith.constant 0 : i32
    return %c0_i32, %c0_i32_0 : i32, i32
  }
  func.func @transform_2(%arg0: i32, %arg1: i32) -> (i32, i32) {
    %c0_i32 = arith.constant 0 : i32
    %c0_i32_0 = arith.constant 0 : i32
    %c0_i32_1 = arith.constant 0 : i32
    return %c0_i32, %c0_i32_0 : i32, i32
  }
  func.func @transform_3(%arg0: i32, %arg1: i32) -> (i32, i32, i32) {
    %c0_i32 = arith.constant 0 : i32
    %c0_i32_0 = arith.constant 0 : i32
    %c0_i32_1 = arith.constant 0 : i32
    return %arg0, %c0_i32, %c0_i32_0 : i32, i32, i32
  }
}

</mosaic_0001>

<llo_original>
// kernel: tpu_custom_call.1
$region0: #{tpu_custom_call.1}
  #allocation0 [shape = 'u32[]', space=smem, size = 0x4, offset = 0x4, fixed_abs, tag = 'smem constant byte address 0x4 - core index']
  #allocation1 [shape = 'u32[144,128]{1,0:T(1,128)}', space=vmem, size = 0x12000, scoped, tag = 'internal scratch']
  #allocation2 [shape = 'f32[64,1]{1,0:T(8,128)}', space=vmem, size = 0x8000, scoped, tag = 'scratch operand']
  #allocation3 [shape = 'f32[64,1]{1,0:T(8,128)}', space=vmem, size = 0x8000, scoped, tag = 'scratch operand']
  %s0 = inlined_call_operand.hbm [shape: f32[2,64,256], index: 0, kind: input, shape index: {}]
  %s1 = inlined_call_operand.vmem [shape: f32[4,64], index: 1, kind: input, shape index: {}]
  %s2 = inlined_call_operand.vmem [shape: f32[64,4], index: 2, kind: input, shape index: {}]
  %s3 = inlined_call_operand.vmem [shape: f32[2,64,1], index: 3, kind: output, shape index: {}]
  %s4 = sld [smem:[#allocation0]]
  $region57: #{tpu_custom_call.1} parent=0
    _
  %s6 = ssub.s32 1, %s4
  %s7 = scalar_select 0, %s6, %s4
  $region1: #{tpu_custom_call.1} parent=0
    #allocation4 [shape = 'u8[65536]{0}', space=vmem, size = 0x10000, scoped, tag = 'input window, operand 0']
    #allocation5 [shape = 's32[2]{0}', space=sflag, size = 0x8, scoped, tag = 'scoped memory for tpu_custom_call.1']
    %8 = vsyncpa [#allocation5], 0
    %s9 = scalar_lea.sflag [#allocation5], 1
    %10 = vsyncpa %s9, 0
    loop: start=0, step=1, limit=6
    $region2: #{tpu_custom_call.1} parent=1 // loop_pre_header
      _
    $region3: #{tpu_custom_call.1} parent=1 // loop_header
      %s12 = sphi 0, %s16
      %p13 = scmp.ge.s32.totalorder %s12, 6
      %s19 = sphi 0, %s31
      %s20 = sphi 0, %s27
      %s21 = sphi 0, %s19
      %s22 = sphi 0, %s20
      %s23 = sphi 0, %s21
      %s24 = sphi 0, %s22
      %s36 = sphi 0, %s38
      %s39 = sphi 0, %s36
      %s40 = sphi 0, %s39
      %s56 = sphi 0, %s40
      %s60 = sphi 0, %s60
      %s62 = sphi 0, %s60
      %s63 = sphi 0, %s62
      %s77 = sphi 0, %s63
      %s81 = sphi 0, %s81
      %s83 = sphi 0, %s81
      %s84 = sphi 0, %s83
      %s98 = sphi 0, %s84
      %s104 = sphi 0, %s106
      %s107 = sphi 0, %s104
      %s108 = sphi 0, %s107
      %s124 = sphi 0, %s108
    $region4: #{tpu_custom_call.1} parent=1 // loop_header_branch
      %15 = sbr.rel (%p13) target = $region8
    $region5: #{tpu_custom_call.1} parent=1 // loop_body
      %s17 = ssub.s32 %s12, 1
      %s18 = ssub.s32 %s12, 2
      %s25 = sadd.s32 1, %s20
      %p26 = scmp.ge.s32.totalorder %s25, 2
      %s27 = scalar_select %p26, 0, %s25
      %s28 = sadd.s32 1, %s19
      %s29 = scalar_select %p26, %s28, %s19
      %p30 = scmp.ge.s32.totalorder %s29, 2
      %s31 = scalar_select %p30, 0, %s29
      %s32 = ssub.s32 %s19, %s31
      %s33 = ssub.s32 %s20, %s27
      %s34 = sor.u32 %s32, %s33
      %p35 = scmp.eq.s32.totalorder %s34, 0
      %s37 = sadd.s32 %s36, 1
      %s38 = scalar_select %p35, %s36, %s37
      %p41 = pneg %p35
      %p42 = scmp.eq.s32.totalorder %s12, 3
      %p43 = por %p41, %p42
      %p44 = scmp.ne.s32.totalorder %s36, %s39
      %p45 = scmp.eq.s32.totalorder %s12, 0
      %p46 = por %p44, %p45
      %p47 = scmp.ne.s32.totalorder %s36, %s39
      %p48 = scmp.eq.s32.totalorder %s17, 3
      %p49 = por %p47, %p48
      %p50 = scmp.ne.s32.totalorder %s39, %s40
      %p51 = scmp.eq.s32.totalorder %s17, 0
      %p52 = por %p50, %p51
      %p53 = scmp.ne.s32.totalorder %s39, %s40
      %p54 = scmp.eq.s32.totalorder %s18, 3
      %p55 = por %p53, %p54
      %p57 = scmp.ne.s32.totalorder %s40, %s56
      %p58 = scmp.eq.s32.totalorder %s18, 0
      %p59 = por %p57, %p58
      %s61 = sadd.s32 %s60, 1
      %p64 = scmp.eq.s32.totalorder %s12, 3
      %p65 = scmp.ne.s32.totalorder %s60, %s62
      %p66 = scmp.eq.s32.totalorder %s12, 0
      %p67 = por %p65, %p66
      %p68 = scmp.ne.s32.totalorder %s60, %s62
      %p69 = scmp.eq.s32.totalorder %s17, 3
      %p70 = por %p68, %p69
      %p71 = scmp.ne.s32.totalorder %s62, %s63
      %p72 = scmp.eq.s32.totalorder %s17, 0
      %p73 = por %p71, %p72
      %p74 = scmp.ne.s32.totalorder %s62, %s63
      %p75 = scmp.eq.s32.totalorder %s18, 3
      %p76 = por %p74, %p75
      %p78 = scmp.ne.s32.totalorder %s63, %s77
      %p79 = scmp.eq.s32.totalorder %s18, 0
      %p80 = por %p78, %p79
      %s82 = sadd.s32 %s81, 1
      %p85 = scmp.eq.s32.totalorder %s12, 3
      %p86 = scmp.ne.s32.totalorder %s81, %s83
      %p87 = scmp.eq.s32.totalorder %s12, 0
      %p88 = por %p86, %p87
      %p89 = scmp.ne.s32.totalorder %s81, %s83
      %p90 = scmp.eq.s32.totalorder %s17, 3
      %p91 = por %p89, %p90
      %p92 = scmp.ne.s32.totalorder %s83, %s84
      %p93 = scmp.eq.s32.totalorder %s17, 0
      %p94 = por %p92, %p93
      %p95 = scmp.ne.s32.totalorder %s83, %s84
      %p96 = scmp.eq.s32.totalorder %s18, 3
      %p97 = por %p95, %p96
      %p99 = scmp.ne.s32.totalorder %s84, %s98
      %p100 = scmp.eq.s32.totalorder %s18, 0
      %p101 = por %p99, %p100
      %s102 = ssub.s32 %s19, %s31
      %p103 = scmp.eq.s32.totalorder %s102, 0
      %s105 = sadd.s32 %s104, 1
      %s106 = scalar_select %p103, %s104, %s105
      %p109 = pneg %p103
      %p110 = scmp.eq.s32.totalorder %s12, 3
      %p111 = por %p109, %p110
      %p112 = scmp.ne.s32.totalorder %s104, %s107
      %p113 = scmp.eq.s32.totalorder %s12, 0
      %p114 = por %p112, %p113
      %p115 = scmp.ne.s32.totalorder %s104, %s107
      %p116 = scmp.eq.s32.totalorder %s17, 3
      %p117 = por %p115, %p116
      %p118 = scmp.ne.s32.totalorder %s107, %s108
      %p119 = scmp.eq.s32.totalorder %s17, 0
      %p120 = por %p118, %p119
      %p121 = scmp.ne.s32.totalorder %s107, %s108
      %p122 = scmp.eq.s32.totalorder %s18, 3
      %p123 = por %p121, %p122
      %p125 = scmp.ne.s32.totalorder %s108, %s124
      %p126 = scmp.eq.s32.totalorder %s18, 0
      %p127 = por %p125, %p126
      %p128 = scmp.le.s32.totalorder 1, %s12
      %p129 = scmp.lt.s32.totalorder %s12, 5
      %p130 = pnand %p128, %p129
      %p131 = pneg %p130
      // Predicated region
      $region9: #{tpu_custom_call.1} parent=5 // pred_check
        _
      $region10: #{tpu_custom_call.1} parent=5 // pred_check_branch
        %133 = sbr.rel (%p130) target = $region12
      $region11: #{tpu_custom_call.1} parent=5 // pred_region
        %s134 = ssub.s32 %s12, 1
        // Predicated region
        $region13: #{tpu_custom_call.1} parent=11 // pred_check
          %p135 = pneg %p73
        $region14: #{tpu_custom_call.1} parent=11 // pred_check_branch
          %137 = sbr.rel (%p135) target = $region16
        $region15: #{tpu_custom_call.1} parent=11 // pred_region
          _
        $region16: #{tpu_custom_call.1} parent=11 // pred_fallthru
          _
        // Predicated region
        $region17: #{tpu_custom_call.1} parent=11 // pred_check
          %p138 = pneg %p94
        $region18: #{tpu_custom_call.1} parent=11 // pred_check_branch
          %140 = sbr.rel (%p138) target = $region20
        $region19: #{tpu_custom_call.1} parent=11 // pred_region
          _
        $region20: #{tpu_custom_call.1} parent=11 // pred_fallthru
          _
      $region12: #{tpu_custom_call.1} parent=5 // pred_fallthru
        _
      %p141 = scmp.lt.s32.totalorder %s12, 4
      // Predicated region
      $region21: #{tpu_custom_call.1} parent=5 // pred_check
        %p142 = pneg %p141
      $region22: #{tpu_custom_call.1} parent=5 // pred_check_branch
        %144 = sbr.rel (%p142) target = $region24
      $region23: #{tpu_custom_call.1} parent=5 // pred_region
        // Predicated region
        $region25: #{tpu_custom_call.1} parent=23 // pred_check
          %p145 = pneg %p46
        $region26: #{tpu_custom_call.1} parent=23 // pred_check_branch
          %147 = sbr.rel (%p145) target = $region28
        $region27: #{tpu_custom_call.1} parent=23 // pred_region
          %s148 = sand.u32 %s36, 1
          %s149 = scalar_lea.sflag [#allocation5], %s148
          %s150 = sand.u32 %s36, 1
          %s151 = smul.addr %s150, 64
          %s152 = scalar_lea.vmem [#allocation4], %s151
          %s154 = ssub.s32 1024, 1024
          %155 = vsyncadd %s149, %s154
          %s156 = smul.addr %s19, 16
          %s157 = sadd.s32 %s20, %s156
          %s158 = smul.addr %s157, 128
          %s159 = scalar_lea.hbm %s0, %s158
          %s160 = sshll.u32 %s152, 4
          %s161 = int_to_ptr.vmem [resolvable:$true] %s160
          %166 = dma.hbm_to_vmem [thread:$0]  %s159, 1024, %s161, %s149, 256, 128, 8
        $region28: #{tpu_custom_call.1} parent=23 // pred_fallthru
          _
      $region24: #{tpu_custom_call.1} parent=5 // pred_fallthru
        _
      %p167 = scmp.le.s32.totalorder 1, %s12
      %p168 = scmp.lt.s32.totalorder %s12, 5
      %p169 = pnand %p167, %p168
      %p170 = pneg %p169
      // Predicated region
      $region29: #{tpu_custom_call.1} parent=5 // pred_check
        _
      $region30: #{tpu_custom_call.1} parent=5 // pred_check_branch
        %172 = sbr.rel (%p169) target = $region32
      $region31: #{tpu_custom_call.1} parent=5 // pred_region
        %s173 = ssub.s32 %s12, 1
        %s174 = sand.u32 %s39, 1
        %s175 = scalar_lea.sflag [#allocation5], %s174
        %s176 = sand.u32 %s39, 1
        %s177 = smul.addr %s176, 64
        %s178 = scalar_lea.vmem [#allocation4], %s177
        // Predicated region
        $region33: #{tpu_custom_call.1} parent=31 // pred_check
          %p179 = pneg %p52
        $region34: #{tpu_custom_call.1} parent=31 // pred_check_branch
          %181 = sbr.rel (%p179) target = $region36
        $region35: #{tpu_custom_call.1} parent=31 // pred_region
          %182 = dma.done %s175, 1024
        $region36: #{tpu_custom_call.1} parent=31 // pred_fallthru
          _
        %s183 = sand.u32 %s39, 1
        %s184 = scalar_lea.sflag [#allocation5], %s183
        %s185 = sand.u32 %s39, 1
        %s186 = smul.addr %s185, 64
        %s187 = scalar_lea.vmem [#allocation4], %s186
        %p188 = pneg %p52
        %p189 = pneg %p49
        %p190 = pneg %p73
        %p191 = pneg %p70
        %p192 = pneg %p94
        %p193 = pneg %p91
        %p194 = pneg %p120
        %p195 = pneg %p117
        %p196 = scmp.lt.s32.totalorder %s21, 1
        %s197 = scalar_select %p196, %s21, 1
        %s198 = smul.addr %s197, 8
        %s199 = smul.addr %s198, 8
        %s200 = scalar_lea.vmem %s3, %s199
        %p201 = scmp.lt.s32.totalorder %s21, 1
        %s202 = scalar_select %p201, %s21, 1
        %s203 = smul.addr %s202, 8
        %s204 = smul.addr %s203, 8
        %s205 = scalar_lea.vmem %s3, %s204
        %p206 = scmp.eq.s32.totalorder %s22, 0
        // Predicated region
        $region37: #{tpu_custom_call.1} parent=31 // pred_check
          %p207 = pneg %p206
        $region38: #{tpu_custom_call.1} parent=31 // pred_check_branch
          %209 = sbr.rel (%p207) target = $region40
        $region39: #{tpu_custom_call.1} parent=31 // pred_region
          %vm210 = vcmask 7168
          %211 = vst.msk [vmem:[#allocation2] sm:$0xff] %vm210, 0.0
          %212 = vst.msk [vmem:[#allocation2 + $0x8] sm:$0xff] %vm210, 0.0
          %213 = vst.msk [vmem:[#allocation2 + $0x10] sm:$0xff] %vm210, 0.0
          %214 = vst.msk [vmem:[#allocation2 + $0x18] sm:$0xff] %vm210, 0.0
          %215 = vst.msk [vmem:[#allocation2 + $0x20] sm:$0xff] %vm210, 0.0
          %216 = vst.msk [vmem:[#allocation2 + $0x28] sm:$0xff] %vm210, 0.0
          %217 = vst.msk [vmem:[#allocation2 + $0x30] sm:$0xff] %vm210, 0.0
          %218 = vst.msk [vmem:[#allocation2 + $0x38] sm:$0xff] %vm210, 0.0
          %219 = vst.msk [vmem:[#allocation3] sm:$0xff] %vm210, -inf
          %220 = vst.msk [vmem:[#allocation3 + $0x8] sm:$0xff] %vm210, -inf
          %221 = vst.msk [vmem:[#allocation3 + $0x10] sm:$0xff] %vm210, -inf
          %222 = vst.msk [vmem:[#allocation3 + $0x18] sm:$0xff] %vm210, -inf
          %223 = vst.msk [vmem:[#allocation3 + $0x20] sm:$0xff] %vm210, -inf
          %224 = vst.msk [vmem:[#allocation3 + $0x28] sm:$0xff] %vm210, -inf
          %225 = vst.msk [vmem:[#allocation3 + $0x30] sm:$0xff] %vm210, -inf
          %226 = vst.msk [vmem:[#allocation3 + $0x38] sm:$0xff] %vm210, -inf
        $region40: #{tpu_custom_call.1} parent=31 // pred_fallthru
          _
        %v227 = vld [vmem:[%s178] sm:$0xff]
        %v228 = vld [vmem:[%s178 + $0x8] sm:$0xff]
        %v229 = vld [vmem:[%s178 + $0x10] sm:$0xff]
        %v230 = vld [vmem:[%s178 + $0x18] sm:$0xff]
        %v231 = vld [vmem:[%s178 + $0x20] sm:$0xff]
        %v232 = vld [vmem:[%s178 + $0x28] sm:$0xff]
        %v233 = vld [vmem:[%s178 + $0x30] sm:$0xff]
        %v234 = vld [vmem:[%s178 + $0x38] sm:$0xff]
        %v235 = vlaneseq
        %v236 = vand.u32 %v235, 127
        %s237 = smul.u32 %s22, 128
        %v238 = vstv %s237
        %v239 = vadd.s32 %v238, %v236
        %vm240 = vcmp.lt.s32.totalorder %v239, 256
        %v241 = vld [vmem:[#allocation2] sm:$0xff]
        %v242 = vld [vmem:[#allocation2 + $0x8] sm:$0xff]
        %v243 = vld [vmem:[#allocation2 + $0x10] sm:$0xff]
        %v244 = vld [vmem:[#allocation2 + $0x18] sm:$0xff]
        %v245 = vld [vmem:[#allocation2 + $0x20] sm:$0xff]
        %v246 = vld [vmem:[#allocation2 + $0x28] sm:$0xff]
        %v247 = vld [vmem:[#allocation2 + $0x30] sm:$0xff]
        %v248 = vld [vmem:[#allocation2 + $0x38] sm:$0xff]
        %v249 = vsel %vm240, %v227, 0.0
        %v250 = vsel %vm240, %v228, 0.0
        %v251 = vsel %vm240, %v229, 0.0
        %v252 = vsel %vm240, %v230, 0.0
        %v253 = vsel %vm240, %v231, 0.0
        %v254 = vsel %vm240, %v232, 0.0
        %v255 = vsel %vm240, %v233, 0.0
        %v256 = vsel %vm240, %v234, 0.0
        %257 = vadd.xlane.f32.xlu0 %v249
        %v258 = vpop.xlane.xlu0 %257
        %259 = vadd.xlane.f32.xlu0 %v250
        %v260 = vpop.xlane.xlu0 %259
        %261 = vadd.xlane.f32.xlu0 %v251
        %v262 = vpop.xlane.xlu0 %261
        %263 = vadd.xlane.f32.xlu0 %v252
        %v264 = vpop.xlane.xlu0 %263
        %265 = vadd.xlane.f32.xlu0 %v253
        %v266 = vpop.xlane.xlu0 %265
        %267 = vadd.xlane.f32.xlu0 %v254
        %v268 = vpop.xlane.xlu0 %267
        %269 = vadd.xlane.f32.xlu0 %v255
        %v270 = vpop.xlane.xlu0 %269
        %271 = vadd.xlane.f32.xlu0 %v256
        %v272 = vpop.xlane.xlu0 %271
        %v273 = vadd.f32 %v241, %v258
        %v274 = vadd.f32 %v242, %v260
        %v275 = vadd.f32 %v243, %v262
        %v276 = vadd.f32 %v244, %v264
        %v277 = vadd.f32 %v245, %v266
        %v278 = vadd.f32 %v246, %v268
        %v279 = vadd.f32 %v247, %v270
        %v280 = vadd.f32 %v248, %v272
        %vm281 = vcmask 7168
        %282 = vst.msk [vmem:[#allocation2] sm:$0xff] %vm281, %v273
        %283 = vst.msk [vmem:[#allocation2 + $0x8] sm:$0xff] %vm281, %v274
        %284 = vst.msk [vmem:[#allocation2 + $0x10] sm:$0xff] %vm281, %v275
        %285 = vst.msk [vmem:[#allocation2 + $0x18] sm:$0xff] %vm281, %v276
        %286 = vst.msk [vmem:[#allocation2 + $0x20] sm:$0xff] %vm281, %v277
        %287 = vst.msk [vmem:[#allocation2 + $0x28] sm:$0xff] %vm281, %v278
        %288 = vst.msk [vmem:[#allocation2 + $0x30] sm:$0xff] %vm281, %v279
        %289 = vst.msk [vmem:[#allocation2 + $0x38] sm:$0xff] %vm281, %v280
        %v290 = vld [vmem:[#allocation3] sm:$0xff]
        %v291 = vld [vmem:[#allocation3 + $0x8] sm:$0xff]
        %v292 = vld [vmem:[#allocation3 + $0x10] sm:$0xff]
        %v293 = vld [vmem:[#allocation3 + $0x18] sm:$0xff]
        %v294 = vld [vmem:[#allocation3 + $0x20] sm:$0xff]
        %v295 = vld [vmem:[#allocation3 + $0x28] sm:$0xff]
        %v296 = vld [vmem:[#allocation3 + $0x30] sm:$0xff]
        %v297 = vld [vmem:[#allocation3 + $0x38] sm:$0xff]
        %v298 = vsel %vm240, %v227, -inf
        %v299 = vsel %vm240, %v228, -inf
        %v300 = vsel %vm240, %v229, -inf
        %v301 = vsel %vm240, %v230, -inf
        %v302 = vsel %vm240, %v231, -inf
        %v303 = vsel %vm240, %v232, -inf
        %v304 = vsel %vm240, %v233, -inf
        %v305 = vsel %vm240, %v234, -inf
        %306 = vmax.xlane.f32.xlu0 %v298
        %v307 = vpop.xlane.xlu0 %306
        %308 = vmax.xlane.f32.xlu0 %v299
        %v309 = vpop.xlane.xlu0 %308
        %310 = vmax.xlane.f32.xlu0 %v300
        %v311 = vpop.xlane.xlu0 %310
        %312 = vmax.xlane.f32.xlu0 %v301
        %v313 = vpop.xlane.xlu0 %312
        %314 = vmax.xlane.f32.xlu0 %v302
        %v315 = vpop.xlane.xlu0 %314
        %316 = vmax.xlane.f32.xlu0 %v303
        %v317 = vpop.xlane.xlu0 %316
        %318 = vmax.xlane.f32.xlu0 %v304
        %v319 = vpop.xlane.xlu0 %318
        %320 = vmax.xlane.f32.xlu0 %v305
        %v321 = vpop.xlane.xlu0 %320
        %v322 = vmax.f32 %v290, %v307
        %v323 = vmax.f32 %v291, %v309
        %v324 = vmax.f32 %v292, %v311
        %v325 = vmax.f32 %v293, %v313
        %v326 = vmax.f32 %v294, %v315
        %v327 = vmax.f32 %v295, %v317
        %v328 = vmax.f32 %v296, %v319
        %v329 = vmax.f32 %v297, %v321
        %330 = vst.msk [vmem:[#allocation3] sm:$0xff] %vm281, %v322
        %331 = vst.msk [vmem:[#allocation3 + $0x8] sm:$0xff] %vm281, %v323
        %332 = vst.msk [vmem:[#allocation3 + $0x10] sm:$0xff] %vm281, %v324
        %333 = vst.msk [vmem:[#allocation3 + $0x18] sm:$0xff] %vm281, %v325
        %334 = vst.msk [vmem:[#allocation3 + $0x20] sm:$0xff] %vm281, %v326
        %335 = vst.msk [vmem:[#allocation3 + $0x28] sm:$0xff] %vm281, %v327
        %336 = vst.msk [vmem:[#allocation3 + $0x30] sm:$0xff] %vm281, %v328
        %337 = vst.msk [vmem:[#allocation3 + $0x38] sm:$0xff] %vm281, %v329
        %p338 = scmp.eq.s32.totalorder %s22, 1
        // Predicated region
        $region41: #{tpu_custom_call.1} parent=31 // pred_check
          %p339 = pneg %p338
        $region42: #{tpu_custom_call.1} parent=31 // pred_check_branch
          %341 = sbr.rel (%p339) target = $region44
        $region43: #{tpu_custom_call.1} parent=31 // pred_region
          %v342 = vld [vmem:[#allocation2] sm:$0xff]
          %v343 = vld [vmem:[#allocation2 + $0x8] sm:$0xff]
          %v344 = vld [vmem:[#allocation2 + $0x10] sm:$0xff]
          %v345 = vld [vmem:[#allocation2 + $0x18] sm:$0xff]
          %v346 = vld [vmem:[#allocation2 + $0x20] sm:$0xff]
          %v347 = vld [vmem:[#allocation2 + $0x28] sm:$0xff]
          %v348 = vld [vmem:[#allocation2 + $0x30] sm:$0xff]
          %v349 = vld [vmem:[#allocation2 + $0x38] sm:$0xff]
          %v350 = vmul.f32 %v342, 0.00390625
          %v351 = vmul.f32 %v343, 0.00390625
          %v352 = vmul.f32 %v344, 0.00390625
          %v353 = vmul.f32 %v345, 0.00390625
          %v354 = vmul.f32 %v346, 0.00390625
          %v355 = vmul.f32 %v347, 0.00390625
          %v356 = vmul.f32 %v348, 0.00390625
          %v357 = vmul.f32 %v349, 0.00390625
          %v358 = vld [vmem:[#allocation3] sm:$0xff]
          %v359 = vld [vmem:[#allocation3 + $0x8] sm:$0xff]
          %v360 = vld [vmem:[#allocation3 + $0x10] sm:$0xff]
          %v361 = vld [vmem:[#allocation3 + $0x18] sm:$0xff]
          %v362 = vld [vmem:[#allocation3 + $0x20] sm:$0xff]
          %v363 = vld [vmem:[#allocation3 + $0x28] sm:$0xff]
          %v364 = vld [vmem:[#allocation3 + $0x30] sm:$0xff]
          %v365 = vld [vmem:[#allocation3 + $0x38] sm:$0xff]
          %374 = vrot.lane.b32.xlu0 %v358, 1
          %v375 = vpop.permute.xlu0 %374
          %376 = vrot.lane.b32.xlu0 %v359, 1
          %v377 = vpop.permute.xlu0 %376
          %378 = vrot.lane.b32.xlu0 %v360, 1
          %v379 = vpop.permute.xlu0 %378
          %380 = vrot.lane.b32.xlu0 %v361, 1
          %v381 = vpop.permute.xlu0 %380
          %382 = vrot.lane.b32.xlu0 %v362, 1
          %v383 = vpop.permute.xlu0 %382
          %384 = vrot.lane.b32.xlu0 %v363, 1
          %v385 = vpop.permute.xlu0 %384
          %386 = vrot.lane.b32.xlu0 %v364, 1
          %v387 = vpop.permute.xlu0 %386
          %388 = vrot.lane.b32.xlu0 %v365, 1
          %v389 = vpop.permute.xlu0 %388
          %v398 = vsel %vm281, %v350, %v375
          %v399 = vsel %vm281, %v351, %v377
          %v400 = vsel %vm281, %v352, %v379
          %v401 = vsel %vm281, %v353, %v381
          %v402 = vsel %vm281, %v354, %v383
          %v403 = vsel %vm281, %v355, %v385
          %v404 = vsel %vm281, %v356, %v387
          %v405 = vsel %vm281, %v357, %v389
          %v406 = vld [vmem:[%s1] sm:$0xf]
          %vm407 = vcmask 523264
          %v409 = vsel %vm407, %v406, 0
          %411 = vmatprep.subr.mxu0 0.0
          %412 = vmatpush1.msra.mxu0 %v398
          %413 = vmatprep.subr.mxu0 0.0
          %414 = vmatpush1.msra.mxu0 %v399
          %415 = vmatprep.subr.mxu0 0.0
          %416 = vmatpush1.msra.mxu0 %v400
          %417 = vmatprep.subr.mxu0 0.0
          %418 = vmatpush1.msra.mxu0 %v401
          %419 = vmatprep.subr.mxu0 0.0
          %420 = vmatpush1.msra.mxu0 %v402
          %421 = vmatprep.subr.mxu0 0.0
          %422 = vmatpush1.msra.mxu0 %v403
          %423 = vmatprep.subr.mxu0 0.0
          %424 = vmatpush1.msra.mxu0 %v404
          %425 = vmatprep.subr.mxu0 0.0
          %426 = vmatpush1.msra.mxu0 %v405
          %427 = vmatprep.subr.mxu0 0.0
          %428 = vmatpush1.msra.mxu0 0.0
          %429 = vmatprep.subr.mxu0 0.0
          %430 = vmatpush1.msra.mxu0 0.0
          %431 = vmatprep.subr.mxu0 0.0
          %432 = vmatpush1.msra.mxu0 0.0
          %433 = vmatprep.subr.mxu0 0.0
          %434 = vmatpush1.msra.mxu0 0.0
          %435 = vmatprep.subr.mxu0 0.0
          %436 = vmatpush1.msra.mxu0 0.0
          %437 = vmatprep.subr.mxu0 0.0
          %438 = vmatpush1.msra.mxu0 0.0
          %439 = vmatprep.subr.mxu0 0.0
          %440 = vmatpush1.msra.mxu0 0.0
          %441 = vmatprep.subr.mxu0 0.0
          %442 = vmatpush1.msra.mxu0 0.0
          %443 = vmatprep.subr.mxu0 0.0
          %444 = vmatpush1.msra.mxu0 0.0
          %445 = vmatprep.subr.mxu0 0.0
          %446 = vmatpush1.msra.mxu0 0.0
          %447 = vmatprep.subr.mxu0 0.0
          %448 = vmatpush1.msra.mxu0 0.0
          %449 = vmatprep.subr.mxu0 0.0
          %450 = vmatpush1.msra.mxu0 0.0
          %451 = vmatprep.subr.mxu0 0.0
          %452 = vmatpush1.msra.mxu0 0.0
          %453 = vmatprep.subr.mxu0 0.0
          %454 = vmatpush1.msra.mxu0 0.0
          %455 = vmatprep.subr.mxu0 0.0
          %456 = vmatpush1.msra.mxu0 0.0
          %457 = vmatprep.subr.mxu0 0.0
          %458 = vmatpush1.msra.mxu0 0.0
          %459 = vmatprep.subr.mxu0 0.0
          %460 = vmatpush1.msra.mxu0 0.0
          %461 = vmatprep.subr.mxu0 0.0
          %462 = vmatpush1.msra.mxu0 0.0
          %463 = vmatprep.subr.mxu0 0.0
          %464 = vmatpush1.msra.mxu0 0.0
          %465 = vmatprep.subr.mxu0 0.0
          %466 = vmatpush1.msra.mxu0 0.0
          %467 = vmatprep.subr.mxu0 0.0
          %468 = vmatpush1.msra.mxu0 0.0
          %469 = vmatprep.subr.mxu0 0.0
          %470 = vmatpush1.msra.mxu0 0.0
          %471 = vmatprep.subr.mxu0 0.0
          %472 = vmatpush1.msra.mxu0 0.0
          %473 = vmatprep.subr.mxu0 0.0
          %474 = vmatpush1.msra.mxu0 0.0
          %475 = vmatprep.mubr.f32.mxu0 0.0
          %476 = vmatmul.mubr.f32.gmra.mrb[0].mxu0 %v409
          %v477 = vpop.f32.mrb[0].mxu0
          %v478 = vadd.f32 0.0, %v477
          %v479 = vpop.f32.mrb[0].mxu0
          %480 = vdwg.mxu0
          %v481 = vmax.f32 %v478, 0.0
          %v482 = vld [vmem:[%s2] sm:$0xff]
          %v483 = vld [vmem:[%s2 + $0x8] sm:$0xff]
          %v484 = vld [vmem:[%s2 + $0x10] sm:$0xff]
          %v485 = vld [vmem:[%s2 + $0x18] sm:$0xff]
          %v486 = vld [vmem:[%s2 + $0x20] sm:$0xff]
          %v487 = vld [vmem:[%s2 + $0x28] sm:$0xff]
          %v488 = vld [vmem:[%s2 + $0x30] sm:$0xff]
          %v489 = vld [vmem:[%s2 + $0x38] sm:$0xff]
          %vm490 = vcmask 31744
          %v492 = vsel %vm490, %v482, 0
          %v495 = vsel %vm490, %v483, 0
          %v498 = vsel %vm490, %v484, 0
          %v501 = vsel %vm490, %v485, 0
          %v504 = vsel %vm490, %v486, 0
          %v507 = vsel %vm490, %v487, 0
          %v510 = vsel %vm490, %v488, 0
          %v513 = vsel %vm490, %v489, 0
          %vm515 = vcmask 1043456
          %v517 = vsel %vm515, %v481, 0
          %519 = vmatprep.subr.mxu0 0.0
          %520 = vmatpush1.msra.mxu0 %v517
          %521 = vmatprep.subr.mxu0 0.0
          %522 = vmatpush1.msra.mxu0 0.0
          %523 = vmatprep.subr.mxu0 0.0
          %524 = vmatpush1.msra.mxu0 0.0
          %525 = vmatprep.subr.mxu0 0.0
          %526 = vmatpush1.msra.mxu0 0.0
          %527 = vmatprep.subr.mxu0 0.0
          %528 = vmatpush1.msra.mxu0 0.0
          %529 = vmatprep.subr.mxu0 0.0
          %530 = vmatpush1.msra.mxu0 0.0
          %531 = vmatprep.subr.mxu0 0.0
          %532 = vmatpush1.msra.mxu0 0.0
          %533 = vmatprep.subr.mxu0 0.0
          %534 = vmatpush1.msra.mxu0 0.0
          %535 = vmatprep.subr.mxu0 0.0
          %536 = vmatpush1.msra.mxu0 0.0
          %537 = vmatprep.subr.mxu0 0.0
          %538 = vmatpush1.msra.mxu0 0.0
          %539 = vmatprep.subr.mxu0 0.0
          %540 = vmatpush1.msra.mxu0 0.0
          %541 = vmatprep.subr.mxu0 0.0
          %542 = vmatpush1.msra.mxu0 0.0
          %543 = vmatprep.subr.mxu0 0.0
          %544 = vmatpush1.msra.mxu0 0.0
          %545 = vmatprep.subr.mxu0 0.0
          %546 = vmatpush1.msra.mxu0 0.0
          %547 = vmatprep.subr.mxu0 0.0
          %548 = vmatpush1.msra.mxu0 0.0
          %549 = vmatprep.subr.mxu0 0.0
          %550 = vmatpush1.msra.mxu0 0.0
          %551 = vmatprep.subr.mxu0 0.0
          %552 = vmatpush1.msra.mxu0 0.0
          %553 = vmatprep.subr.mxu0 0.0
          %554 = vmatpush1.msra.mxu0 0.0
          %555 = vmatprep.subr.mxu0 0.0
          %556 = vmatpush1.msra.mxu0 0.0
          %557 = vmatprep.subr.mxu0 0.0
          %558 = vmatpush1.msra.mxu0 0.0
          %559 = vmatprep.subr.mxu0 0.0
          %560 = vmatpush1.msra.mxu0 0.0
          %561 = vmatprep.subr.mxu0 0.0
          %562 = vmatpush1.msra.mxu0 0.0
          %563 = vmatprep.subr.mxu0 0.0
          %564 = vmatpush1.msra.mxu0 0.0
          %565 = vmatprep.subr.mxu0 0.0
          %566 = vmatpush1.msra.mxu0 0.0
          %567 = vmatprep.subr.mxu0 0.0
          %568 = vmatpush1.msra.mxu0 0.0
          %569 = vmatprep.subr.mxu0 0.0
          %570 = vmatpush1.msra.mxu0 0.0
          %571 = vmatprep.subr.mxu0 0.0
          %572 = vmatpush1.msra.mxu0 0.0
          %573 = vmatprep.subr.mxu0 0.0
          %574 = vmatpush1.msra.mxu0 0.0
          %575 = vmatprep.subr.mxu0 0.0
          %576 = vmatpush1.msra.mxu0 0.0
          %577 = vmatprep.subr.mxu0 0.0
          %578 = vmatpush1.msra.mxu0 0.0
          %579 = vmatprep.subr.mxu0 0.0
          %580 = vmatpush1.msra.mxu0 0.0
          %581 = vmatprep.subr.mxu0 0.0
          %582 = vmatpush1.msra.mxu0 0.0
          %583 = vmatprep.mubr.f32.mxu0 0.0
          %584 = vmatmul.mubr.f32.gmra.mrb[0].mxu0 %v492
          %v585 = vpop.f32.mrb[0].mxu0
          %v586 = vadd.f32 0.0, %v585
          %v587 = vpop.f32.mrb[0].mxu0
          %588 = vmatprep.mubr.f32.mxu0 0.0
          %589 = vmatmul.mubr.f32.gmra.mrb[0].mxu0 %v495
          %v590 = vpop.f32.mrb[0].mxu0
          %v591 = vadd.f32 0.0, %v590
          %v592 = vpop.f32.mrb[0].mxu0
          %593 = vmatprep.mubr.f32.mxu0 0.0
          %594 = vmatmul.mubr.f32.gmra.mrb[0].mxu0 %v498
          %v595 = vpop.f32.mrb[0].mxu0
          %v596 = vadd.f32 0.0, %v595
          %v597 = vpop.f32.mrb[0].mxu0
          %598 = vmatprep.mubr.f32.mxu0 0.0
          %599 = vmatmul.mubr.f32.gmra.mrb[0].mxu0 %v501
          %v600 = vpop.f32.mrb[0].mxu0
          %v601 = vadd.f32 0.0, %v600
          %v602 = vpop.f32.mrb[0].mxu0
          %603 = vmatprep.mubr.f32.mxu0 0.0
          %604 = vmatmul.mubr.f32.gmra.mrb[0].mxu0 %v504
          %v605 = vpop.f32.mrb[0].mxu0
          %v606 = vadd.f32 0.0, %v605
          %v607 = vpop.f32.mrb[0].mxu0
          %608 = vmatprep.mubr.f32.mxu0 0.0
          %609 = vmatmul.mubr.f32.gmra.mrb[0].mxu0 %v507
          %v610 = vpop.f32.mrb[0].mxu0
          %v611 = vadd.f32 0.0, %v610
          %v612 = vpop.f32.mrb[0].mxu0
          %613 = vmatprep.mubr.f32.mxu0 0.0
          %614 = vmatmul.mubr.f32.gmra.mrb[0].mxu0 %v510
          %v615 = vpop.f32.mrb[0].mxu0
          %v616 = vadd.f32 0.0, %v615
          %v617 = vpop.f32.mrb[0].mxu0
          %618 = vmatprep.mubr.f32.mxu0 0.0
          %619 = vmatmul.mubr.f32.gmra.mrb[0].mxu0 %v513
          %v620 = vpop.f32.mrb[0].mxu0
          %v621 = vadd.f32 0.0, %v620
          %v622 = vpop.f32.mrb[0].mxu0
          %623 = vdwg.mxu0
          %632 = vrot.lane.b32.xlu0 %v586, 127
          %v633 = vpop.permute.xlu0 %632
          %634 = vrot.lane.b32.xlu0 %v591, 127
          %v635 = vpop.permute.xlu0 %634
          %636 = vrot.lane.b32.xlu0 %v596, 127
          %v637 = vpop.permute.xlu0 %636
          %638 = vrot.lane.b32.xlu0 %v601, 127
          %v639 = vpop.permute.xlu0 %638
          %640 = vrot.lane.b32.xlu0 %v606, 127
          %v641 = vpop.permute.xlu0 %640
          %642 = vrot.lane.b32.xlu0 %v611, 127
          %v643 = vpop.permute.xlu0 %642
          %644 = vrot.lane.b32.xlu0 %v616, 127
          %v645 = vpop.permute.xlu0 %644
          %646 = vrot.lane.b32.xlu0 %v621, 127
          %v647 = vpop.permute.xlu0 %646
          %v656 = vadd.f32 %v586, %v633
          %v657 = vadd.f32 %v591, %v635
          %v658 = vadd.f32 %v596, %v637
          %v659 = vadd.f32 %v601, %v639
          %v660 = vadd.f32 %v606, %v641
          %v661 = vadd.f32 %v611, %v643
          %v662 = vadd.f32 %v616, %v645
          %v663 = vadd.f32 %v621, %v647
          %v664 = vxor.u32 %v656, 2147483648
          %v665 = vxor.u32 %v657, 2147483648
          %v666 = vxor.u32 %v658, 2147483648
          %v667 = vxor.u32 %v659, 2147483648
          %v668 = vxor.u32 %v660, 2147483648
          %v669 = vxor.u32 %v661, 2147483648
          %v670 = vxor.u32 %v662, 2147483648
          %v671 = vxor.u32 %v663, 2147483648
          %v672 = vmul.f32 %v664, 1.442695
          %v673 = vpow.pop %v672
          %v674 = vmul.f32 %v665, 1.442695
          %v675 = vpow.pop %v674
          %v676 = vmul.f32 %v666, 1.442695
          %v677 = vpow.pop %v676
          %v678 = vmul.f32 %v667, 1.442695
          %v679 = vpow.pop %v678
          %v680 = vmul.f32 %v668, 1.442695
          %v681 = vpow.pop %v680
          %v682 = vmul.f32 %v669, 1.442695
          %v683 = vpow.pop %v682
          %v684 = vmul.f32 %v670, 1.442695
          %v685 = vpow.pop %v684
          %v686 = vmul.f32 %v671, 1.442695
          %v687 = vpow.pop %v686
          %v688 = vadd.f32 %v673, 1.0
          %v689 = vadd.f32 %v675, 1.0
          %v690 = vadd.f32 %v677, 1.0
          %v691 = vadd.f32 %v679, 1.0
          %v692 = vadd.f32 %v681, 1.0
          %v693 = vadd.f32 %v683, 1.0
          %v694 = vadd.f32 %v685, 1.0
          %v695 = vadd.f32 %v687, 1.0
          %v696 = vrcp.pop %v688
          %v697 = vmul.f32 1.0, %v696
          %v698 = vrcp.pop %v689
          %v699 = vmul.f32 1.0, %v698
          %v700 = vrcp.pop %v690
          %v701 = vmul.f32 1.0, %v700
          %v702 = vrcp.pop %v691
          %v703 = vmul.f32 1.0, %v702
          %v704 = vrcp.pop %v692
          %v705 = vmul.f32 1.0, %v704
          %v706 = vrcp.pop %v693
          %v707 = vmul.f32 1.0, %v706
          %v708 = vrcp.pop %v694
          %v709 = vmul.f32 1.0, %v708
          %v710 = vrcp.pop %v695
          %v711 = vmul.f32 1.0, %v710
          %712 = vst.msk [vmem:[%s205] sm:$0xff] %vm281, %v697
          %713 = vst.msk [vmem:[%s205 + $0x8] sm:$0xff] %vm281, %v699
          %714 = vst.msk [vmem:[%s205 + $0x10] sm:$0xff] %vm281, %v701
          %715 = vst.msk [vmem:[%s205 + $0x18] sm:$0xff] %vm281, %v703
          %716 = vst.msk [vmem:[%s205 + $0x20] sm:$0xff] %vm281, %v705
          %717 = vst.msk [vmem:[%s205 + $0x28] sm:$0xff] %vm281, %v707
          %718 = vst.msk [vmem:[%s205 + $0x30] sm:$0xff] %vm281, %v709
          %719 = vst.msk [vmem:[%s205 + $0x38] sm:$0xff] %vm281, %v711
        $region44: #{tpu_custom_call.1} parent=31 // pred_fallthru
          _
        %p720 = scmp.lt.s32.totalorder %s21, 1
        %s721 = scalar_select %p720, %s21, 1
        %s722 = smul.addr %s721, 8
        %s723 = smul.addr %s722, 8
        %s724 = scalar_lea.vmem %s3, %s723
        // Predicated region
        $region45: #{tpu_custom_call.1} parent=31 // pred_check
          %p725 = pneg %p117
        $region46: #{tpu_custom_call.1} parent=31 // pred_check_branch
          %727 = sbr.rel (%p725) target = $region48
        $region47: #{tpu_custom_call.1} parent=31 // pred_region
          _
        $region48: #{tpu_custom_call.1} parent=31 // pred_fallthru
          _
      $region32: #{tpu_custom_call.1} parent=5 // pred_fallthru
        _
      %p728 = scmp.le.s32.totalorder 2, %s12
      // Predicated region
      $region49: #{tpu_custom_call.1} parent=5 // pred_check
        %p729 = pneg %p728
      $region50: #{tpu_custom_call.1} parent=5 // pred_check_branch
        %731 = sbr.rel (%p729) target = $region52
      $region51: #{tpu_custom_call.1} parent=5 // pred_region
        %s732 = ssub.s32 %s12, 2
        // Predicated region
        $region53: #{tpu_custom_call.1} parent=51 // pred_check
          %p733 = pneg %p123
        $region54: #{tpu_custom_call.1} parent=51 // pred_check_branch
          %735 = sbr.rel (%p733) target = $region56
        $region55: #{tpu_custom_call.1} parent=51 // pred_region
          %p736 = scmp.lt.s32.totalorder %s23, 1
          %s737 = scalar_select %p736, %s23, 1
          %s738 = smul.addr %s737, 8
          %s739 = smul.addr %s738, 8
          %s740 = scalar_lea.vmem %s3, %s739
        $region56: #{tpu_custom_call.1} parent=51 // pred_fallthru
          _
      $region52: #{tpu_custom_call.1} parent=5 // pred_fallthru
        _
    $region6: #{tpu_custom_call.1} parent=1 // loop_footer
      %s16 = sadd.s32 1, %s12
    $region7: #{tpu_custom_call.1} parent=1 // loop_footer_branch
      %11 = sbr.rel target = $region3
    $region8: #{tpu_custom_call.1} parent=1 // loop_exit
      _
    %741 = vsyncpa [#allocation5], 1
    %s742 = scalar_lea.sflag [#allocation5], 1
    %743 = vsyncpa %s742, 1

</llo_original>
